<compile_context>
chip_gen: v5e
topology: v5e:2x2
jax: 0.10.0
libtpu: 0.0.40
codegen_flags: <defaults>
</compile_context>

<pallas_src>
import functools
import math

import jax
import jax.numpy as jnp
from jax.experimental import pallas as pl
from jax.experimental.pallas import tpu as pltpu


def _round_up(n, m):
    return (n + m - 1) // m * m


def club_forward_kernel(x_ref, y_ref, w1_ref, b1_ref, w2_ref, b2_ref,
                        ystats_ref, out_ref, *, y_dim, tile_n, n_real,
                        needs_mask):
    # x tile: (tile_n, x_dim) in matmul dtype; y tile: (tile_n, y_dim) f32.
    x = x_ref[...]
    y = y_ref[...].astype(jnp.float32)

    # Fused layer 1: both MLPs in one MXU op.  w1 = [w1_mu | w1_lv]  (x_dim, 2H)
    h = jnp.maximum(
        jnp.dot(x, w1_ref[...], preferred_element_type=jnp.float32)
        + b1_ref[...], 0.0)                                        # (T, 2H) f32

    # Fused layer 2: block-diagonal weight (2H, 2*y_dim).
    z = (jnp.dot(h.astype(w2_ref.dtype), w2_ref[...],
                 preferred_element_type=jnp.float32)
         + b2_ref[...])                                            # (T, 2*y_dim)

    mu = z[:, :y_dim]                                              # (T, y_dim)
    logvar = jnp.tanh(z[:, y_dim:])                                # (T, y_dim), EUP
    inv_var = jnp.exp(-logvar)                                     # EUP

    stats = ystats_ref[...].astype(jnp.float32)                    # (2, y_dim)
    mean_y = stats[0:1, :]
    var_y = stats[1:2, :]

    # Fused positive - negative with the centered (numerically stable) form:
    #   mean_j (y_j - mu)^2 = var_y + (mean_y - mu)^2
    d_pos = mu - y
    d_neg = mean_y - mu
    contrib = 0.5 * inv_var * (var_y + d_neg * d_neg - d_pos * d_pos)  # (T, y_dim)

    if needs_mask:  # zero padded rows (static choice; only when N % tile != 0)
        row = (pl.program_id(0) * tile_n
               + jax.lax.broadcasted_iota(jnp.int32, contrib.shape, 0))
        contrib = jnp.where(row < n_real, contrib, 0.0)

    partial = jnp.sum(contrib)
    # Lane-dense (1, 8, 128) partial block; the wrapper reads [i, 0, 0].
    out_ref[...] = jnp.full(out_ref.shape, partial, dtype=jnp.float32)


def club_forward(x, y, params, *, tile_n=1024, matmul_dtype=jnp.float32):
    """CLUB.forward(x, y) -> scalar MI upper bound (same semantics as PyTorch)."""
    n, x_dim = x.shape
    _, y_dim = y.shape
    hidden = params["w1_mu"].shape[1]

    # ---- global y column statistics (must cover the FULL batch; hoisted out
    # ---- of the tile loop so tiling does not change the negative term).
    yf = y.astype(jnp.float32)
    mean_y = jnp.mean(yf, axis=0, keepdims=True)                   # (1, y_dim)
    var_y = jnp.mean((yf - mean_y) ** 2, axis=0, keepdims=True)    # (1, y_dim)
    ystats = jnp.concatenate([mean_y, var_y], axis=0)              # (2, y_dim)

    # ---- fuse the two MLPs' weights (done once, outside the kernel).
    w1 = jnp.concatenate([params["w1_mu"], params["w1_lv"]], axis=1)   # (x_dim, 2H)
    b1 = jnp.concatenate([params["b1_mu"], params["b1_lv"]], axis=1)   # (1, 2H)
    w2 = jnp.zeros((2 * hidden, 2 * y_dim), jnp.float32)
    w2 = w2.at[:hidden, :y_dim].set(params["w2_mu"])
    w2 = w2.at[hidden:, y_dim:].set(params["w2_lv"])                   # block-diag
    b2 = jnp.concatenate([params["b2_mu"], params["b2_lv"]], axis=1)   # (1, 2*y_dim)

    # MXU operands optionally narrowed to bf16 (v6e/v7x); epilogue stays f32.
    w1 = w1.astype(matmul_dtype)
    w2 = w2.astype(matmul_dtype)
    x_in = x.astype(matmul_dtype)
    y_in = y.astype(jnp.float32)

    # ---- row tiling over the batch axis.
    tile = max(8, min(tile_n, _round_up(n, 8)))
    n_pad = _round_up(n, tile)
    if n_pad != n:
        x_in = jnp.pad(x_in, ((0, n_pad - n), (0, 0)))
        y_in = jnp.pad(y_in, ((0, n_pad - n), (0, 0)))
    num_tiles = n_pad // tile

    kernel = functools.partial(
        club_forward_kernel, y_dim=y_dim, tile_n=tile, n_real=n,
        needs_mask=(n_pad != n))

    grid_spec = pltpu.PrefetchScalarGridSpec(
        num_scalar_prefetch=0,
        grid=(num_tiles,),
        in_specs=[
            pl.BlockSpec((tile, x_dim), lambda i: (i, 0)),            # x tile
            pl.BlockSpec((tile, y_dim), lambda i: (i, 0)),            # y tile
            pl.BlockSpec((x_dim, 2 * hidden), lambda i: (0, 0)),      # resident w1
            pl.BlockSpec((1, 2 * hidden), lambda i: (0, 0)),          # resident b1
            pl.BlockSpec((2 * hidden, 2 * y_dim), lambda i: (0, 0)),  # resident w2
            pl.BlockSpec((1, 2 * y_dim), lambda i: (0, 0)),           # resident b2
            pl.BlockSpec((2, y_dim), lambda i: (0, 0)),               # resident y stats
        ],
        out_specs=pl.BlockSpec((1, 8, 128), lambda i: (i, 0, 0)),     # per-tile partial
    )

    partials = pl.pallas_call(
        kernel,
        out_shape=jax.ShapeDtypeStruct((num_tiles, 8, 128), jnp.float32),
        grid_spec=grid_spec,
        compiler_params=pltpu.CompilerParams(
            dimension_semantics=("parallel",),       # shards tiles across v7x's 2 TCs
            # Generous cap (>> 2x double-buffered tiles + resident weights), still
            # within every generation's VMEM (v5e/v6e 128 MiB, v7x 64 MiB physical).
            vmem_limit_bytes=32 * 1024 * 1024),
    )(x_in, y_in, w1, b1, w2, b2, ystats)

    # Finish the tiny reduction outside the kernel.
    return jnp.sum(partials[:, 0, 0]) / n


def init_club_params(key, x_dim, y_dim, hidden_size):
    """Deterministic init mimicking torch.nn.Linear default (U(-1/sqrt(fan_in), +))."""
    def linear(k, fan_in, fan_out):
        kw, kb = jax.random.split(k)
        bound = 1.0 / math.sqrt(fan_in)
        w = jax.random.uniform(kw, (fan_in, fan_out), jnp.float32, -bound, bound)
        b = jax.random.uniform(kb, (1, fan_out), jnp.float32, -bound, bound)
        return w, b

    k1, k2, k3, k4 = jax.random.split(key, 4)
    w1_mu, b1_mu = linear(k1, x_dim, hidden_size)
    w2_mu, b2_mu = linear(k2, hidden_size, y_dim)
    w1_lv, b1_lv = linear(k3, x_dim, hidden_size)
    w2_lv, b2_lv = linear(k4, hidden_size, y_dim)
    return dict(w1_mu=w1_mu, b1_mu=b1_mu, w2_mu=w2_mu, b2_mu=b2_mu,
                w1_lv=w1_lv, b1_lv=b1_lv, w2_lv=w2_lv, b2_lv=b2_lv)


def club_forward_ref(x, y, p):
    """Pure-JAX reference matching the PyTorch forward exactly (for validation)."""
    h_mu = jnp.maximum(x @ p["w1_mu"] + p["b1_mu"], 0.0)
    mu = h_mu @ p["w2_mu"] + p["b2_mu"]
    h_lv = jnp.maximum(x @ p["w1_lv"] + p["b1_lv"], 0.0)
    logvar = jnp.tanh(h_lv @ p["w2_lv"] + p["b2_lv"])
    positive = -(mu - y) ** 2 / 2.0 / jnp.exp(logvar)
    negative = -((y[None, :, :] - mu[:, None, :]) ** 2).mean(axis=1) / 2.0 / jnp.exp(logvar)
    return (positive.sum(-1) - negative.sum(-1)).mean()


if __name__ == "__main__":
    # Small shapes consistent with the module: [sample_size, x_dim/y_dim].
    N, X_DIM, Y_DIM, HIDDEN = 200, 16, 16, 32
    TILE_N = 64   # -> 4 grid steps; exercises tiling + padded-row masking

    key = jax.random.PRNGKey(0)
    kx, ky, kp = jax.random.split(key, 3)
    x = jax.random.normal(kx, (N, X_DIM), jnp.float32)
    y = jax.random.normal(ky, (N, Y_DIM), jnp.float32)
    params = init_club_params(kp, X_DIM, Y_DIM, HIDDEN)

    out = jax.block_until_ready(club_forward(x, y, params, tile_n=TILE_N))
    ref = jax.block_until_ready(club_forward_ref(x, y, params))
    assert jnp.allclose(out, ref, atol=1e-3, rtol=1e-3), (out, ref)
    print("KERNEL_OK")
</pallas_src>

<mosaic_0001>
module attributes {stable_mosaic.version = 11 : i64} {
  func.func @club_forward_kernel(%arg0: i32, %arg1: memref<64x16xf32, #tpu.memory_space<vmem>>, %arg2: memref<64x16xf32, #tpu.memory_space<vmem>>, %arg3: memref<16x64xf32, #tpu.memory_space<vmem>>, %arg4: memref<1x64xf32, #tpu.memory_space<vmem>>, %arg5: memref<64x32xf32, #tpu.memory_space<vmem>>, %arg6: memref<1x32xf32, #tpu.memory_space<vmem>>, %arg7: memref<2x16xf32, #tpu.memory_space<vmem>>, %arg8: memref<1x8x128xf32, #tpu.memory_space<vmem>>) attributes {dimension_semantics = [#tpu.dimension_semantics<parallel>], iteration_bounds = array<i64: 4>, scalar_prefetch = 0 : i64, scratch_operands = 0 : i64, tpu.core_type = #tpu.core_type<tc>, window_params = [{transform_indices = @transform_0, window_bounds = array<i64: 64, 16>}, {transform_indices = @transform_1, window_bounds = array<i64: 64, 16>}, {pipeline_mode = #tpu.pipeline_mode<synchronous>, transform_indices = @transform_2, window_bounds = array<i64: 16, 64>}, {pipeline_mode = #tpu.pipeline_mode<synchronous>, transform_indices = @transform_3, window_bounds = array<i64: 1, 64>}, {pipeline_mode = #tpu.pipeline_mode<synchronous>, transform_indices = @transform_4, window_bounds = array<i64: 64, 32>}, {pipeline_mode = #tpu.pipeline_mode<synchronous>, transform_indices = @transform_5, window_bounds = array<i64: 1, 32>}, {pipeline_mode = #tpu.pipeline_mode<synchronous>, transform_indices = @transform_6, window_bounds = array<i64: 2, 16>}, {transform_indices = @transform_7, window_bounds = array<i64: 1, 8, 128>}]} {
    %c0 = arith.constant 0 : index
    %c0_0 = arith.constant 0 : index
    %0 = vector.load %arg1[%c0, %c0_0] : memref<64x16xf32, #tpu.memory_space<vmem>>, vector<64x16xf32>
    %c0_1 = arith.constant 0 : index
    %c0_2 = arith.constant 0 : index
    %1 = vector.load %arg2[%c0_1, %c0_2] : memref<64x16xf32, #tpu.memory_space<vmem>>, vector<64x16xf32>
    %c0_3 = arith.constant 0 : index
    %c0_4 = arith.constant 0 : index
    %2 = vector.load %arg3[%c0_3, %c0_4] : memref<16x64xf32, #tpu.memory_space<vmem>>, vector<16x64xf32>
    %cst = arith.constant dense<0.000000e+00> : vector<64x64xf32>
    %3 = tpu.matmul %0, %2, %cst {dimension_numbers = #tpu.dot_dimension_numbers<[1], [0], [0], [1], [0, 0, 1, 1], [], []>} : vector<64x16xf32>, vector<16x64xf32>, vector<64x64xf32> -> vector<64x64xf32>
    %c0_5 = arith.constant 0 : index
    %c0_6 = arith.constant 0 : index
    %4 = vector.load %arg4[%c0_5, %c0_6] : memref<1x64xf32, #tpu.memory_space<vmem>>, vector<1x64xf32>
    %5 = vector.broadcast %4 : vector<1x64xf32> to vector<64x64xf32>
    %6 = arith.addf %3, %5 : vector<64x64xf32>
    %cst_7 = arith.constant 0.000000e+00 : f32
    %7 = vector.broadcast %cst_7 : f32 to vector<64x64xf32>
    %8 = arith.maximumf %6, %7 : vector<64x64xf32>
    %c0_8 = arith.constant 0 : index
    %c0_9 = arith.constant 0 : index
    %9 = vector.load %arg5[%c0_8, %c0_9] : memref<64x32xf32, #tpu.memory_space<vmem>>, vector<64x32xf32>
    %cst_10 = arith.constant dense<0.000000e+00> : vector<64x32xf32>
    %10 = tpu.matmul %8, %9, %cst_10 {dimension_numbers = #tpu.dot_dimension_numbers<[1], [0], [0], [1], [0, 0, 1, 1], [], []>} : vector<64x64xf32>, vector<64x32xf32>, vector<64x32xf32> -> vector<64x32xf32>
    %c0_11 = arith.constant 0 : index
    %c0_12 = arith.constant 0 : index
    %11 = vector.load %arg6[%c0_11, %c0_12] : memref<1x32xf32, #tpu.memory_space<vmem>>, vector<1x32xf32>
    %12 = vector.broadcast %11 : vector<1x32xf32> to vector<64x32xf32>
    %13 = arith.addf %10, %12 : vector<64x32xf32>
    %14 = vector.extract_strided_slice %13 {offsets = [0, 0], sizes = [64, 16], strides = [1, 1]} : vector<64x32xf32> to vector<64x16xf32>
    %15 = vector.extract_strided_slice %13 {offsets = [0, 16], sizes = [64, 16], strides = [1, 1]} : vector<64x32xf32> to vector<64x16xf32>
    %16 = math.tanh %15 : vector<64x16xf32>
    %cst_13 = arith.constant 0.000000e+00 : f32
    %17 = vector.broadcast %cst_13 : f32 to vector<64x16xf32>
    %18 = arith.subf %17, %16 : vector<64x16xf32>
    %19 = math.exp %18 : vector<64x16xf32>
    %c0_14 = arith.constant 0 : index
    %c0_15 = arith.constant 0 : index
    %20 = vector.load %arg7[%c0_14, %c0_15] : memref<2x16xf32, #tpu.memory_space<vmem>>, vector<2x16xf32>
    %21 = vector.extract_strided_slice %20 {offsets = [0, 0], sizes = [1, 16], strides = [1, 1]} : vector<2x16xf32> to vector<1x16xf32>
    %22 = vector.extract_strided_slice %20 {offsets = [1, 0], sizes = [1, 16], strides = [1, 1]} : vector<2x16xf32> to vector<1x16xf32>
    %23 = arith.subf %14, %1 : vector<64x16xf32>
    %24 = vector.broadcast %21 : vector<1x16xf32> to vector<64x16xf32>
    %25 = arith.subf %24, %14 : vector<64x16xf32>
    %cst_16 = arith.constant 5.000000e-01 : f32
    %26 = vector.broadcast %cst_16 : f32 to vector<64x16xf32>
    %27 = arith.mulf %26, %19 : vector<64x16xf32>
    %28 = arith.mulf %25, %25 : vector<64x16xf32>
    %29 = vector.broadcast %22 : vector<1x16xf32> to vector<64x16xf32>
    %30 = arith.addf %29, %28 : vector<64x16xf32>
    %31 = arith.mulf %23, %23 : vector<64x16xf32>
    %32 = arith.subf %30, %31 : vector<64x16xf32>
    %33 = arith.mulf %27, %32 : vector<64x16xf32>
    %c64_i32 = arith.constant 64 : i32
    %34 = arith.muli %arg0, %c64_i32 : i32
    %35 = tpu.iota {dimensions = array<i32: 0>} : vector<64x16xi32>
    %36 = vector.broadcast %34 : i32 to vector<64x16xi32>
    %37 = arith.addi %36, %35 : vector<64x16xi32>
    %c200_i32 = arith.constant 200 : i32
    %38 = vector.broadcast %c200_i32 : i32 to vector<64x16xi32>
    %39 = arith.cmpi slt, %37, %38 : vector<64x16xi32>
    %cst_17 = arith.constant 0.000000e+00 : f32
    %40 = vector.broadcast %cst_17 : f32 to vector<64x16xf32>
    %41 = arith.select %39, %33, %40 : vector<64x16xi1>, vector<64x16xf32>
    %42 = vector.shape_cast %41 : vector<64x16xf32> to vector<1x64x16xf32>
    %cst_18 = arith.constant dense<0.000000e+00> : vector<1xf32>
    %43 = vector.multi_reduction <add>, %42, %cst_18 [1, 2] : vector<1x64x16xf32> to vector<1xf32>
    %44 = vector.shape_cast %43 : vector<1xf32> to vector<1x1x1xf32>
    %45 = vector.extract %44[0, 0, 0] : f32 from vector<1x1x1xf32>
    %46 = vector.broadcast %45 : f32 to vector<1x8x128xf32>
    %c0_19 = arith.constant 0 : index
    %c0_20 = arith.constant 0 : index
    %c0_21 = arith.constant 0 : index
    %47 = vector.load %arg8[%c0_19, %c0_20, %c0_21] : memref<1x8x128xf32, #tpu.memory_space<vmem>>, vector<1x8x128xf32>
    tpu.vector_store %arg8[%c0_19, %c0_20, %c0_21], %46 {strides = array<i32>} : memref<1x8x128xf32, #tpu.memory_space<vmem>>, vector<1x8x128xf32>,
    return
  }
  func.func @transform_0(%arg0: i32) -> (i32, i32) {
    %c0_i32 = arith.constant 0 : i32
    %c0_i32_0 = arith.constant 0 : i32
    return %arg0, %c0_i32 : i32, i32
  }
  func.func @transform_1(%arg0: i32) -> (i32, i32) {
    %c0_i32 = arith.constant 0 : i32
    %c0_i32_0 = arith.constant 0 : i32
    return %arg0, %c0_i32 : i32, i32
  }
  func.func @transform_2(%arg0: i32) -> (i32, i32) {
    %c0_i32 = arith.constant 0 : i32
    %c0_i32_0 = arith.constant 0 : i32
    %c0_i32_1 = arith.constant 0 : i32
    return %c0_i32, %c0_i32_0 : i32, i32
  }
  func.func @transform_3(%arg0: i32) -> (i32, i32) {
    %c0_i32 = arith.constant 0 : i32
    %c0_i32_0 = arith.constant 0 : i32
    %c0_i32_1 = arith.constant 0 : i32
    return %c0_i32, %c0_i32_0 : i32, i32
  }
  func.func @transform_4(%arg0: i32) -> (i32, i32) {
    %c0_i32 = arith.constant 0 : i32
    %c0_i32_0 = arith.constant 0 : i32
    %c0_i32_1 = arith.constant 0 : i32
    return %c0_i32, %c0_i32_0 : i32, i32
  }
  func.func @transform_5(%arg0: i32) -> (i32, i32) {
    %c0_i32 = arith.constant 0 : i32
    %c0_i32_0 = arith.constant 0 : i32
    %c0_i32_1 = arith.constant 0 : i32
    return %c0_i32, %c0_i32_0 : i32, i32
  }
  func.func @transform_6(%arg0: i32) -> (i32, i32) {
    %c0_i32 = arith.constant 0 : i32
    %c0_i32_0 = arith.constant 0 : i32
    %c0_i32_1 = arith.constant 0 : i32
    return %c0_i32, %c0_i32_0 : i32, i32
  }
  func.func @transform_7(%arg0: i32) -> (i32, i32, i32) {
    %c0_i32 = arith.constant 0 : i32
    %c0_i32_0 = arith.constant 0 : i32
    %c0_i32_1 = arith.constant 0 : i32
    return %arg0, %c0_i32, %c0_i32_0 : i32, i32, i32
  }
}

</mosaic_0001>

<llo_original>
// kernel: tpu_custom_call.1
$region0: #{tpu_custom_call.1}
  #allocation0 [shape = 'u32[]', space=smem, size = 0x4, offset = 0x4, fixed_abs, tag = 'smem constant byte address 0x4 - core index']
  #allocation1 [shape = 'u32[72,128]{1,0:T(1,128)}', space=vmem, size = 0x9000, scoped, tag = 'internal scratch']
  %s0 = inlined_call_operand.vmem [shape: f32[256,16], index: 0, kind: input, shape index: {}]
  %s1 = inlined_call_operand.vmem [shape: f32[256,16], index: 1, kind: input, shape index: {}]
  %s2 = inlined_call_operand.vmem [shape: f32[16,64], index: 2, kind: input, shape index: {}]
  %s3 = inlined_call_operand.vmem [shape: f32[1,64], index: 3, kind: input, shape index: {}]
  %s4 = inlined_call_operand.vmem [shape: f32[64,32], index: 4, kind: input, shape index: {}]
  %s5 = inlined_call_operand.vmem [shape: f32[1,32], index: 5, kind: input, shape index: {}]
  %s6 = inlined_call_operand.vmem [shape: f32[2,16], index: 6, kind: input, shape index: {}]
  %s7 = inlined_call_operand.hbm [shape: f32[4,8,128], index: 7, kind: output, shape index: {}]
  %s8 = sld [smem:[#allocation0]]
  $region61: #{tpu_custom_call.1} parent=0
    _
  %s10 = ssub.s32 1, %s8
  %s11 = scalar_select 0, %s10, %s8
  $region1: #{tpu_custom_call.1} parent=0
    #allocation2 [shape = 'u8[8192]{0}', space=vmem, size = 0x2000, scoped, tag = 'output window, operand 0']
    #allocation3 [shape = 's32[2]{0}', space=sflag, size = 0x8, scoped, tag = 'scoped memory for tpu_custom_call.1']
    %12 = vsyncpa [#allocation3], 0
    %s13 = scalar_lea.sflag [#allocation3], 1
    %14 = vsyncpa %s13, 0
    loop: start=0, step=1, limit=6
    $region2: #{tpu_custom_call.1} parent=1 // loop_pre_header
      _
    $region3: #{tpu_custom_call.1} parent=1 // loop_header
      %s16 = sphi 0, %s20
      %p17 = scmp.ge.s32.totalorder %s16, 6
      %s26 = sphi 0, %s28
      %s29 = sphi 0, %s26
      %s30 = sphi 0, %s29
      %s46 = sphi 0, %s30
      %s52 = sphi 0, %s54
      %s55 = sphi 0, %s52
      %s56 = sphi 0, %s55
      %s72 = sphi 0, %s56
      %s76 = sphi 0, %s76
      %s78 = sphi 0, %s76
      %s79 = sphi 0, %s78
      %s93 = sphi 0, %s79
      %s97 = sphi 0, %s97
      %s99 = sphi 0, %s97
      %s100 = sphi 0, %s99
      %s114 = sphi 0, %s100
      %s118 = sphi 0, %s118
      %s120 = sphi 0, %s118
      %s121 = sphi 0, %s120
      %s135 = sphi 0, %s121
      %s139 = sphi 0, %s139
      %s141 = sphi 0, %s139
      %s142 = sphi 0, %s141
      %s156 = sphi 0, %s142
      %s160 = sphi 0, %s160
      %s162 = sphi 0, %s160
      %s163 = sphi 0, %s162
      %s177 = sphi 0, %s163
      %s183 = sphi 0, %s185
      %s186 = sphi 0, %s183
      %s187 = sphi 0, %s186
      %s203 = sphi 0, %s187
    $region4: #{tpu_custom_call.1} parent=1 // loop_header_branch
      %19 = sbr.rel (%p17) target = $region8
    $region5: #{tpu_custom_call.1} parent=1 // loop_body
      %s21 = ssub.s32 %s16, 1
      %s22 = ssub.s32 %s16, 2
      %s23 = sadd.s32 %s16, 1
      %s24 = ssub.s32 %s16, %s23
      %p25 = scmp.eq.s32.totalorder %s24, 0
      %s27 = sadd.s32 %s26, 1
      %s28 = scalar_select %p25, %s26, %s27
      %p31 = pneg %p25
      %p32 = scmp.eq.s32.totalorder %s16, 3
      %p33 = por %p31, %p32
      %p34 = scmp.ne.s32.totalorder %s26, %s29
      %p35 = scmp.eq.s32.totalorder %s16, 0
      %p36 = por %p34, %p35
      %p37 = scmp.ne.s32.totalorder %s26, %s29
      %p38 = scmp.eq.s32.totalorder %s21, 3
      %p39 = por %p37, %p38
      %p40 = scmp.ne.s32.totalorder %s29, %s30
      %p41 = scmp.eq.s32.totalorder %s21, 0
      %p42 = por %p40, %p41
      %p43 = scmp.ne.s32.totalorder %s29, %s30
      %p44 = scmp.eq.s32.totalorder %s22, 3
      %p45 = por %p43, %p44
      %p47 = scmp.ne.s32.totalorder %s30, %s46
      %p48 = scmp.eq.s32.totalorder %s22, 0
      %p49 = por %p47, %p48
      %s50 = ssub.s32 %s16, %s23
      %p51 = scmp.eq.s32.totalorder %s50, 0
      %s53 = sadd.s32 %s52, 1
      %s54 = scalar_select %p51, %s52, %s53
      %p57 = pneg %p51
      %p58 = scmp.eq.s32.totalorder %s16, 3
      %p59 = por %p57, %p58
      %p60 = scmp.ne.s32.totalorder %s52, %s55
      %p61 = scmp.eq.s32.totalorder %s16, 0
      %p62 = por %p60, %p61
      %p63 = scmp.ne.s32.totalorder %s52, %s55
      %p64 = scmp.eq.s32.totalorder %s21, 3
      %p65 = por %p63, %p64
      %p66 = scmp.ne.s32.totalorder %s55, %s56
      %p67 = scmp.eq.s32.totalorder %s21, 0
      %p68 = por %p66, %p67
      %p69 = scmp.ne.s32.totalorder %s55, %s56
      %p70 = scmp.eq.s32.totalorder %s22, 3
      %p71 = por %p69, %p70
      %p73 = scmp.ne.s32.totalorder %s56, %s72
      %p74 = scmp.eq.s32.totalorder %s22, 0
      %p75 = por %p73, %p74
      %s77 = sadd.s32 %s76, 1
      %p80 = scmp.eq.s32.totalorder %s16, 3
      %p81 = scmp.ne.s32.totalorder %s76, %s78
      %p82 = scmp.eq.s32.totalorder %s16, 0
      %p83 = por %p81, %p82
      %p84 = scmp.ne.s32.totalorder %s76, %s78
      %p85 = scmp.eq.s32.totalorder %s21, 3
      %p86 = por %p84, %p85
      %p87 = scmp.ne.s32.totalorder %s78, %s79
      %p88 = scmp.eq.s32.totalorder %s21, 0
      %p89 = por %p87, %p88
      %p90 = scmp.ne.s32.totalorder %s78, %s79
      %p91 = scmp.eq.s32.totalorder %s22, 3
      %p92 = por %p90, %p91
      %p94 = scmp.ne.s32.totalorder %s79, %s93
      %p95 = scmp.eq.s32.totalorder %s22, 0
      %p96 = por %p94, %p95
      %s98 = sadd.s32 %s97, 1
      %p101 = scmp.eq.s32.totalorder %s16, 3
      %p102 = scmp.ne.s32.totalorder %s97, %s99
      %p103 = scmp.eq.s32.totalorder %s16, 0
      %p104 = por %p102, %p103
      %p105 = scmp.ne.s32.totalorder %s97, %s99
      %p106 = scmp.eq.s32.totalorder %s21, 3
      %p107 = por %p105, %p106
      %p108 = scmp.ne.s32.totalorder %s99, %s100
      %p109 = scmp.eq.s32.totalorder %s21, 0
      %p110 = por %p108, %p109
      %p111 = scmp.ne.s32.totalorder %s99, %s100
      %p112 = scmp.eq.s32.totalorder %s22, 3
      %p113 = por %p111, %p112
      %p115 = scmp.ne.s32.totalorder %s100, %s114
      %p116 = scmp.eq.s32.totalorder %s22, 0
      %p117 = por %p115, %p116
      %s119 = sadd.s32 %s118, 1
      %p122 = scmp.eq.s32.totalorder %s16, 3
      %p123 = scmp.ne.s32.totalorder %s118, %s120
      %p124 = scmp.eq.s32.totalorder %s16, 0
      %p125 = por %p123, %p124
      %p126 = scmp.ne.s32.totalorder %s118, %s120
      %p127 = scmp.eq.s32.totalorder %s21, 3
      %p128 = por %p126, %p127
      %p129 = scmp.ne.s32.totalorder %s120, %s121
      %p130 = scmp.eq.s32.totalorder %s21, 0
      %p131 = por %p129, %p130
      %p132 = scmp.ne.s32.totalorder %s120, %s121
      %p133 = scmp.eq.s32.totalorder %s22, 3
      %p134 = por %p132, %p133
      %p136 = scmp.ne.s32.totalorder %s121, %s135
      %p137 = scmp.eq.s32.totalorder %s22, 0
      %p138 = por %p136, %p137
      %s140 = sadd.s32 %s139, 1
      %p143 = scmp.eq.s32.totalorder %s16, 3
      %p144 = scmp.ne.s32.totalorder %s139, %s141
      %p145 = scmp.eq.s32.totalorder %s16, 0
      %p146 = por %p144, %p145
      %p147 = scmp.ne.s32.totalorder %s139, %s141
      %p148 = scmp.eq.s32.totalorder %s21, 3
      %p149 = por %p147, %p148
      %p150 = scmp.ne.s32.totalorder %s141, %s142
      %p151 = scmp.eq.s32.totalorder %s21, 0
      %p152 = por %p150, %p151
      %p153 = scmp.ne.s32.totalorder %s141, %s142
      %p154 = scmp.eq.s32.totalorder %s22, 3
      %p155 = por %p153, %p154
      %p157 = scmp.ne.s32.totalorder %s142, %s156
      %p158 = scmp.eq.s32.totalorder %s22, 0
      %p159 = por %p157, %p158
      %s161 = sadd.s32 %s160, 1
      %p164 = scmp.eq.s32.totalorder %s16, 3
      %p165 = scmp.ne.s32.totalorder %s160, %s162
      %p166 = scmp.eq.s32.totalorder %s16, 0
      %p167 = por %p165, %p166
      %p168 = scmp.ne.s32.totalorder %s160, %s162
      %p169 = scmp.eq.s32.totalorder %s21, 3
      %p170 = por %p168, %p169
      %p171 = scmp.ne.s32.totalorder %s162, %s163
      %p172 = scmp.eq.s32.totalorder %s21, 0
      %p173 = por %p171, %p172
      %p174 = scmp.ne.s32.totalorder %s162, %s163
      %p175 = scmp.eq.s32.totalorder %s22, 3
      %p176 = por %p174, %p175
      %p178 = scmp.ne.s32.totalorder %s163, %s177
      %p179 = scmp.eq.s32.totalorder %s22, 0
      %p180 = por %p178, %p179
      %s181 = ssub.s32 %s16, %s23
      %p182 = scmp.eq.s32.totalorder %s181, 0
      %s184 = sadd.s32 %s183, 1
      %s185 = scalar_select %p182, %s183, %s184
      %p188 = pneg %p182
      %p189 = scmp.eq.s32.totalorder %s16, 3
      %p190 = por %p188, %p189
      %p191 = scmp.ne.s32.totalorder %s183, %s186
      %p192 = scmp.eq.s32.totalorder %s16, 0
      %p193 = por %p191, %p192
      %p194 = scmp.ne.s32.totalorder %s183, %s186
      %p195 = scmp.eq.s32.totalorder %s21, 3
      %p196 = por %p194, %p195
      %p197 = scmp.ne.s32.totalorder %s186, %s187
      %p198 = scmp.eq.s32.totalorder %s21, 0
      %p199 = por %p197, %p198
      %p200 = scmp.ne.s32.totalorder %s186, %s187
      %p201 = scmp.eq.s32.totalorder %s22, 3
      %p202 = por %p200, %p201
      %p204 = scmp.ne.s32.totalorder %s187, %s203
      %p205 = scmp.eq.s32.totalorder %s22, 0
      %p206 = por %p204, %p205
      %p207 = scmp.le.s32.totalorder 1, %s16
      %p208 = scmp.lt.s32.totalorder %s16, 5
      %p209 = pnand %p207, %p208
      %p210 = pneg %p209
      // Predicated region
      $region9: #{tpu_custom_call.1} parent=5 // pred_check
        _
      $region10: #{tpu_custom_call.1} parent=5 // pred_check_branch
        %212 = sbr.rel (%p209) target = $region12
      $region11: #{tpu_custom_call.1} parent=5 // pred_region
        %s213 = ssub.s32 %s16, 1
        // Predicated region
        $region13: #{tpu_custom_call.1} parent=11 // pred_check
          %p214 = pneg %p89
        $region14: #{tpu_custom_call.1} parent=11 // pred_check_branch
          %216 = sbr.rel (%p214) target = $region16
        $region15: #{tpu_custom_call.1} parent=11 // pred_region
          _
        $region16: #{tpu_custom_call.1} parent=11 // pred_fallthru
          _
        // Predicated region
        $region17: #{tpu_custom_call.1} parent=11 // pred_check
          %p217 = pneg %p110
        $region18: #{tpu_custom_call.1} parent=11 // pred_check_branch
          %219 = sbr.rel (%p217) target = $region20
        $region19: #{tpu_custom_call.1} parent=11 // pred_region
          _
        $region20: #{tpu_custom_call.1} parent=11 // pred_fallthru
          _
        // Predicated region
        $region21: #{tpu_custom_call.1} parent=11 // pred_check
          %p220 = pneg %p131
        $region22: #{tpu_custom_call.1} parent=11 // pred_check_branch
          %222 = sbr.rel (%p220) target = $region24
        $region23: #{tpu_custom_call.1} parent=11 // pred_region
          _
        $region24: #{tpu_custom_call.1} parent=11 // pred_fallthru
          _
        // Predicated region
        $region25: #{tpu_custom_call.1} parent=11 // pred_check
          %p223 = pneg %p152
        $region26: #{tpu_custom_call.1} parent=11 // pred_check_branch
          %225 = sbr.rel (%p223) target = $region28
        $region27: #{tpu_custom_call.1} parent=11 // pred_region
          _
        $region28: #{tpu_custom_call.1} parent=11 // pred_fallthru
          _
        // Predicated region
        $region29: #{tpu_custom_call.1} parent=11 // pred_check
          %p226 = pneg %p173
        $region30: #{tpu_custom_call.1} parent=11 // pred_check_branch
          %228 = sbr.rel (%p226) target = $region32
        $region31: #{tpu_custom_call.1} parent=11 // pred_region
          _
        $region32: #{tpu_custom_call.1} parent=11 // pred_fallthru
          _
      $region12: #{tpu_custom_call.1} parent=5 // pred_fallthru
        _
      %p229 = scmp.lt.s32.totalorder %s16, 4
      // Predicated region
      $region33: #{tpu_custom_call.1} parent=5 // pred_check
        %p230 = pneg %p229
      $region34: #{tpu_custom_call.1} parent=5 // pred_check_branch
        %232 = sbr.rel (%p230) target = $region36
      $region35: #{tpu_custom_call.1} parent=5 // pred_region
        // Predicated region
        $region37: #{tpu_custom_call.1} parent=35 // pred_check
          %p233 = pneg %p36
        $region38: #{tpu_custom_call.1} parent=35 // pred_check_branch
          %235 = sbr.rel (%p233) target = $region40
        $region39: #{tpu_custom_call.1} parent=35 // pred_region
          %s236 = smul.u32 8, %s16
          %p237 = scmp.lt.s32.totalorder %s236, 31
          %s238 = scalar_select %p237, %s236, 31
          %s239 = smul.addr %s238, 8
          %s240 = scalar_lea.vmem %s0, %s239
          %s241 = smul.u32 8, %s16
        $region40: #{tpu_custom_call.1} parent=35 // pred_fallthru
          _
        // Predicated region
        $region41: #{tpu_custom_call.1} parent=35 // pred_check
          %p242 = pneg %p62
        $region42: #{tpu_custom_call.1} parent=35 // pred_check_branch
          %244 = sbr.rel (%p242) target = $region44
        $region43: #{tpu_custom_call.1} parent=35 // pred_region
          %s245 = smul.u32 8, %s16
          %p246 = scmp.lt.s32.totalorder %s245, 31
          %s247 = scalar_select %p246, %s245, 31
          %s248 = smul.addr %s247, 8
          %s249 = scalar_lea.vmem %s1, %s248
          %s250 = smul.u32 8, %s16
        $region44: #{tpu_custom_call.1} parent=35 // pred_fallthru
          _
      $region36: #{tpu_custom_call.1} parent=5 // pred_fallthru
        _
      %p251 = scmp.le.s32.totalorder 1, %s16
      %p252 = scmp.lt.s32.totalorder %s16, 5
      %p253 = pnand %p251, %p252
      %p254 = pneg %p253
      // Predicated region
      $region45: #{tpu_custom_call.1} parent=5 // pred_check
        _
      $region46: #{tpu_custom_call.1} parent=5 // pred_check_branch
        %256 = sbr.rel (%p253) target = $region48
      $region47: #{tpu_custom_call.1} parent=5 // pred_region
        %s257 = ssub.s32 %s16, 1
        %s258 = smul.u32 8, %s21
        %p259 = scmp.lt.s32.totalorder %s258, 31
        %s260 = scalar_select %p259, %s258, 31
        %s261 = smul.addr %s260, 8
        %s262 = scalar_lea.vmem %s0, %s261
        %p263 = pneg %p42
        %p264 = pneg %p39
        %s265 = smul.u32 8, %s21
        %p266 = scmp.lt.s32.totalorder %s265, 31
        %s267 = scalar_select %p266, %s265, 31
        %s268 = smul.addr %s267, 8
        %s269 = scalar_lea.vmem %s1, %s268
        %p270 = pneg %p68
        %p271 = pneg %p65
        %p272 = pneg %p89
        %p273 = pneg %p86
        %p274 = pneg %p110
        %p275 = pneg %p107
        %p276 = pneg %p131
        %p277 = pneg %p128
        %p278 = pneg %p152
        %p279 = pneg %p149
        %p280 = pneg %p173
        %p281 = pneg %p170
        %p282 = pneg %p199
        %p283 = pneg %p196
        %s284 = sand.u32 %s186, 1
        %s285 = scalar_lea.sflag [#allocation3], %s284
        %s286 = sand.u32 %s186, 1
        %s287 = smul.addr %s286, 8
        %s288 = scalar_lea.vmem [#allocation2], %s287
        %s289 = smul.u32 8, %s21
        %p290 = scmp.lt.s32.totalorder %s289, 31
        %s291 = scalar_select %p290, %s289, 31
        %s292 = smul.addr %s291, 8
        %s293 = scalar_lea.vmem %s0, %s292
        %s294 = smul.u32 8, %s21
        %s295 = smul.u32 8, %s21
        %p296 = scmp.lt.s32.totalorder %s295, 31
        %s297 = scalar_select %p296, %s295, 31
        %s298 = smul.addr %s297, 8
        %s299 = scalar_lea.vmem %s1, %s298
        %s300 = smul.u32 8, %s21
        %v301 = vld [vmem:[%s293] sm:$0xff]
        %v302 = vld [vmem:[%s293 + $0x8] sm:$0xff]
        %v303 = vld [vmem:[%s293 + $0x10] sm:$0xff]
        %v304 = vld [vmem:[%s293 + $0x18] sm:$0xff]
        %v305 = vld [vmem:[%s293 + $0x20] sm:$0xff]
        %v306 = vld [vmem:[%s293 + $0x28] sm:$0xff]
        %v307 = vld [vmem:[%s293 + $0x30] sm:$0xff]
        %v308 = vld [vmem:[%s293 + $0x38] sm:$0xff]
        %v309 = vld [vmem:[%s299] sm:$0xff]
        %v310 = vld [vmem:[%s299 + $0x8] sm:$0xff]
        %v311 = vld [vmem:[%s299 + $0x10] sm:$0xff]
        %v312 = vld [vmem:[%s299 + $0x18] sm:$0xff]
        %v313 = vld [vmem:[%s299 + $0x20] sm:$0xff]
        %v314 = vld [vmem:[%s299 + $0x28] sm:$0xff]
        %v315 = vld [vmem:[%s299 + $0x30] sm:$0xff]
        %v316 = vld [vmem:[%s299 + $0x38] sm:$0xff]
        %v317 = vld [vmem:[%s2] sm:$0xff]
        %v318 = vld [vmem:[%s2 + $0x8] sm:$0xff]
        %v319 = vld [vmem:[%s3] sm:$0x1]
        %v321 = vperm.slane %v319, 0
        %vm323 = vcmask 130048
        %v325 = vsel %vm323, %v301, 0
        %v328 = vsel %vm323, %v302, 0
        %v331 = vsel %vm323, %v303, 0
        %v334 = vsel %vm323, %v304, 0
        %v337 = vsel %vm323, %v305, 0
        %v340 = vsel %vm323, %v306, 0
        %v343 = vsel %vm323, %v307, 0
        %v346 = vsel %vm323, %v308, 0
        %348 = vmatpush.msra.mxu0 0.0
        %349 = vmatpush.msra.mxu0 0.0
        %350 = vmatpush.msra.mxu0 0.0
        %351 = vmatpush.msra.mxu0 0.0
        %352 = vmatpush.msra.mxu0 0.0
        %353 = vmatpush.msra.mxu0 0.0
        %354 = vmatpush.msra.mxu0 0.0
        %355 = vmatpush.msra.mxu0 0.0
        %356 = vmatpush.msra.mxu0 0.0
        %357 = vmatpush.msra.mxu0 0.0
        %358 = vmatpush.msra.mxu0 0.0
        %359 = vmatpush.msra.mxu0 0.0
        %360 = vmatpush.msra.mxu0 0.0
        %361 = vmatpush.msra.mxu0 0.0
        %362 = vmatpush.msra.mxu0 %v318
        %363 = vmatpush.msra.mxu0 %v317
        %364 = vmatmul.f32.gmra.mxu0 %v325
        %v365 = vpop.f32.mrf.mxu0
        %v366 = vadd.f32 %v321, %v365
        %367 = vmatmul.f32.gmra.mxu0 %v328
        %v368 = vpop.f32.mrf.mxu0
        %v369 = vadd.f32 %v321, %v368
        %370 = vmatmul.f32.gmra.mxu0 %v331
        %v371 = vpop.f32.mrf.mxu0
        %v372 = vadd.f32 %v321, %v371
        %373 = vmatmul.f32.gmra.mxu0 %v334
        %v374 = vpop.f32.mrf.mxu0
        %v375 = vadd.f32 %v321, %v374
        %376 = vmatmul.f32.gmra.mxu0 %v337
        %v377 = vpop.f32.mrf.mxu0
        %v378 = vadd.f32 %v321, %v377
        %379 = vmatmul.f32.gmra.mxu0 %v340
        %v380 = vpop.f32.mrf.mxu0
        %v381 = vadd.f32 %v321, %v380
        %382 = vmatmul.f32.gmra.mxu0 %v343
        %v383 = vpop.f32.mrf.mxu0
        %v384 = vadd.f32 %v321, %v383
        %385 = vmatmul.f32.gmra.mxu0 %v346
        %v386 = vpop.f32.mrf.mxu0
        %v387 = vadd.f32 %v321, %v386
        %388 = vdwg.mxu0
        %v389 = vmax.f32 %v366, 0.0
        %v390 = vmax.f32 %v369, 0.0
        %v391 = vmax.f32 %v372, 0.0
        %v392 = vmax.f32 %v375, 0.0
        %v393 = vmax.f32 %v378, 0.0
        %v394 = vmax.f32 %v381, 0.0
        %v395 = vmax.f32 %v384, 0.0
        %v396 = vmax.f32 %v387, 0.0
        %v397 = vld [vmem:[%s4] sm:$0xff]
        %v398 = vld [vmem:[%s4 + $0x8] sm:$0xff]
        %v399 = vld [vmem:[%s4 + $0x10] sm:$0xff]
        %v400 = vld [vmem:[%s4 + $0x18] sm:$0xff]
        %v401 = vld [vmem:[%s4 + $0x20] sm:$0xff]
        %v402 = vld [vmem:[%s4 + $0x28] sm:$0xff]
        %v403 = vld [vmem:[%s4 + $0x30] sm:$0xff]
        %v404 = vld [vmem:[%s4 + $0x38] sm:$0xff]
        %v405 = vld [vmem:[%s5] sm:$0x1]
        %v407 = vperm.slane %v405, 0
        %vm409 = vcmask 523264
        %v411 = vsel %vm409, %v389, 0
        %v414 = vsel %vm409, %v390, 0
        %v417 = vsel %vm409, %v391, 0
        %v420 = vsel %vm409, %v392, 0
        %v423 = vsel %vm409, %v393, 0
        %v426 = vsel %vm409, %v394, 0
        %v429 = vsel %vm409, %v395, 0
        %v432 = vsel %vm409, %v396, 0
        %434 = vmatpush.msra.mxu0 0.0
        %435 = vmatpush.msra.mxu0 0.0
        %436 = vmatpush.msra.mxu0 0.0
        %437 = vmatpush.msra.mxu0 0.0
        %438 = vmatpush.msra.mxu0 0.0
        %439 = vmatpush.msra.mxu0 0.0
        %440 = vmatpush.msra.mxu0 0.0
        %441 = vmatpush.msra.mxu0 0.0
        %442 = vmatpush.msra.mxu0 %v404
        %443 = vmatpush.msra.mxu0 %v403
        %444 = vmatpush.msra.mxu0 %v402
        %445 = vmatpush.msra.mxu0 %v401
        %446 = vmatpush.msra.mxu0 %v400
        %447 = vmatpush.msra.mxu0 %v399
        %448 = vmatpush.msra.mxu0 %v398
        %449 = vmatpush.msra.mxu0 %v397
        %450 = vmatmul.f32.gmra.mxu0 %v411
        %v451 = vpop.f32.mrf.mxu0
        %v452 = vadd.f32 %v407, %v451
        %453 = vmatmul.f32.gmra.mxu0 %v414
        %v454 = vpop.f32.mrf.mxu0
        %v455 = vadd.f32 %v407, %v454
        %456 = vmatmul.f32.gmra.mxu0 %v417
        %v457 = vpop.f32.mrf.mxu0
        %v458 = vadd.f32 %v407, %v457
        %459 = vmatmul.f32.gmra.mxu0 %v420
        %v460 = vpop.f32.mrf.mxu0
        %v461 = vadd.f32 %v407, %v460
        %462 = vmatmul.f32.gmra.mxu0 %v423
        %v463 = vpop.f32.mrf.mxu0
        %v464 = vadd.f32 %v407, %v463
        %465 = vmatmul.f32.gmra.mxu0 %v426
        %v466 = vpop.f32.mrf.mxu0
        %v467 = vadd.f32 %v407, %v466
        %468 = vmatmul.f32.gmra.mxu0 %v429
        %v469 = vpop.f32.mrf.mxu0
        %v470 = vadd.f32 %v407, %v469
        %471 = vmatmul.f32.gmra.mxu0 %v432
        %v472 = vpop.f32.mrf.mxu0
        %v473 = vadd.f32 %v407, %v472
        %474 = vdwg.mxu0
        %v475 = vtanh.pop %v452
        %v476 = vtanh.pop %v455
        %v477 = vtanh.pop %v458
        %v478 = vtanh.pop %v461
        %v479 = vtanh.pop %v464
        %v480 = vtanh.pop %v467
        %v481 = vtanh.pop %v470
        %v482 = vtanh.pop %v473
        %v483 = vsub.f32 0.0, %v475
        %v484 = vsub.f32 0.0, %v476
        %v485 = vsub.f32 0.0, %v477
        %v486 = vsub.f32 0.0, %v478
        %v487 = vsub.f32 0.0, %v479
        %v488 = vsub.f32 0.0, %v480
        %v489 = vsub.f32 0.0, %v481
        %v490 = vsub.f32 0.0, %v482
        %v491 = vmul.f32 %v483, 1.442695
        %v492 = vpow.pop %v491
        %v493 = vmul.f32 %v484, 1.442695
        %v494 = vpow.pop %v493
        %v495 = vmul.f32 %v485, 1.442695
        %v496 = vpow.pop %v495
        %v497 = vmul.f32 %v486, 1.442695
        %v498 = vpow.pop %v497
        %v499 = vmul.f32 %v487, 1.442695
        %v500 = vpow.pop %v499
        %v501 = vmul.f32 %v488, 1.442695
        %v502 = vpow.pop %v501
        %v503 = vmul.f32 %v489, 1.442695
        %v504 = vpow.pop %v503
        %v505 = vmul.f32 %v490, 1.442695
        %v506 = vpow.pop %v505
        %v507 = vld [vmem:[%s6] sm:$0x3]
        %v508 = vsub.f32 %v452, %v309
        %v509 = vsub.f32 %v455, %v310
        %v510 = vsub.f32 %v458, %v311
        %v511 = vsub.f32 %v461, %v312
        %v512 = vsub.f32 %v464, %v313
        %v513 = vsub.f32 %v467, %v314
        %v514 = vsub.f32 %v470, %v315
        %v515 = vsub.f32 %v473, %v316
        %v516 = vperm.slane %v507, 0
        %v517 = vsub.f32 %v516, %v452
        %v518 = vsub.f32 %v516, %v455
        %v519 = vsub.f32 %v516, %v458
        %v520 = vsub.f32 %v516, %v461
        %v521 = vsub.f32 %v516, %v464
        %v522 = vsub.f32 %v516, %v467
        %v523 = vsub.f32 %v516, %v470
        %v524 = vsub.f32 %v516, %v473
        %v525 = vmul.f32 %v492, 0.5
        %v526 = vmul.f32 %v494, 0.5
        %v527 = vmul.f32 %v496, 0.5
        %v528 = vmul.f32 %v498, 0.5
        %v529 = vmul.f32 %v500, 0.5
        %v530 = vmul.f32 %v502, 0.5
        %v531 = vmul.f32 %v504, 0.5
        %v532 = vmul.f32 %v506, 0.5
        %v533 = vmul.f32 %v517, %v517
        %v534 = vmul.f32 %v518, %v518
        %v535 = vmul.f32 %v519, %v519
        %v536 = vmul.f32 %v520, %v520
        %v537 = vmul.f32 %v521, %v521
        %v538 = vmul.f32 %v522, %v522
        %v539 = vmul.f32 %v523, %v523
        %v540 = vmul.f32 %v524, %v524
        %v541 = vperm.slane %v507, 1
        %v542 = vadd.f32 %v541, %v533
        %v543 = vadd.f32 %v541, %v534
        %v544 = vadd.f32 %v541, %v535
        %v545 = vadd.f32 %v541, %v536
        %v546 = vadd.f32 %v541, %v537
        %v547 = vadd.f32 %v541, %v538
        %v548 = vadd.f32 %v541, %v539
        %v549 = vadd.f32 %v541, %v540
        %v550 = vmul.f32 %v508, %v508
        %v551 = vmul.f32 %v509, %v509
        %v552 = vmul.f32 %v510, %v510
        %v553 = vmul.f32 %v511, %v511
        %v554 = vmul.f32 %v512, %v512
        %v555 = vmul.f32 %v513, %v513
        %v556 = vmul.f32 %v514, %v514
        %v557 = vmul.f32 %v515, %v515
        %v558 = vsub.f32 %v542, %v550
        %v559 = vsub.f32 %v543, %v551
        %v560 = vsub.f32 %v544, %v552
        %v561 = vsub.f32 %v545, %v553
        %v562 = vsub.f32 %v546, %v554
        %v563 = vsub.f32 %v547, %v555
        %v564 = vsub.f32 %v548, %v556
        %v565 = vsub.f32 %v549, %v557
        %574 = vrot.lane.b32.xlu0 %v558, 16
        %v575 = vpop.permute.xlu0 %574
        %576 = vrot.lane.b32.xlu0 %v559, 16
        %v577 = vpop.permute.xlu0 %576
        %578 = vrot.lane.b32.xlu0 %v560, 16
        %v579 = vpop.permute.xlu0 %578
        %580 = vrot.lane.b32.xlu0 %v561, 16
        %v581 = vpop.permute.xlu0 %580
        %582 = vrot.lane.b32.xlu0 %v562, 16
        %v583 = vpop.permute.xlu0 %582
        %584 = vrot.lane.b32.xlu0 %v563, 16
        %v585 = vpop.permute.xlu0 %584
        %586 = vrot.lane.b32.xlu0 %v564, 16
        %v587 = vpop.permute.xlu0 %586
        %588 = vrot.lane.b32.xlu0 %v565, 16
        %v589 = vpop.permute.xlu0 %588
        %v598 = vmul.f32 %v525, %v575
        %v599 = vmul.f32 %v526, %v577
        %v600 = vmul.f32 %v527, %v579
        %v601 = vmul.f32 %v528, %v581
        %v602 = vmul.f32 %v529, %v583
        %v603 = vmul.f32 %v530, %v585
        %v604 = vmul.f32 %v531, %v587
        %v605 = vmul.f32 %v532, %v589
        %s606 = smul.u32 %s21, 64
        %v607 = vlaneseq
        %v608 = vshrl.u32 %v607, 7
        %v609 = vadd.s32 %v608, 8
        %v610 = vadd.s32 %v608, 16
        %v611 = vadd.s32 %v608, 24
        %v612 = vadd.s32 %v608, 32
        %v613 = vadd.s32 %v608, 40
        %v614 = vadd.s32 %v608, 48
        %v615 = vadd.s32 %v608, 56
        %v616 = vstv %s606
        %v617 = vadd.s32 %v616, %v608
        %v618 = vadd.s32 %v616, %v609
        %v619 = vadd.s32 %v616, %v610
        %v620 = vadd.s32 %v616, %v611
        %v621 = vadd.s32 %v616, %v612
        %v622 = vadd.s32 %v616, %v613
        %v623 = vadd.s32 %v616, %v614
        %v624 = vadd.s32 %v616, %v615
        %vm625 = vcmp.lt.s32.totalorder %v617, 200
        %vm626 = vcmp.lt.s32.totalorder %v618, 200
        %vm627 = vcmp.lt.s32.totalorder %v619, 200
        %vm628 = vcmp.lt.s32.totalorder %v620, 200
        %vm629 = vcmp.lt.s32.totalorder %v621, 200
        %vm630 = vcmp.lt.s32.totalorder %v622, 200
        %vm631 = vcmp.lt.s32.totalorder %v623, 200
        %vm632 = vcmp.lt.s32.totalorder %v624, 200
        %v633 = vsel %vm625, %v598, 0.0
        %v634 = vsel %vm626, %v599, 0.0
        %v635 = vsel %vm627, %v600, 0.0
        %v636 = vsel %vm628, %v601, 0.0
        %v637 = vsel %vm629, %v602, 0.0
        %v638 = vsel %vm630, %v603, 0.0
        %v639 = vsel %vm631, %v604, 0.0
        %v640 = vsel %vm632, %v605, 0.0
        %649 = vrot.lane.b32.xlu0 %v633, 112
        %v650 = vpop.permute.xlu0 %649
        %651 = vrot.lane.b32.xlu0 %v634, 112
        %v652 = vpop.permute.xlu0 %651
        %653 = vrot.lane.b32.xlu0 %v635, 112
        %v654 = vpop.permute.xlu0 %653
        %655 = vrot.lane.b32.xlu0 %v636, 112
        %v656 = vpop.permute.xlu0 %655
        %657 = vrot.lane.b32.xlu0 %v637, 112
        %v658 = vpop.permute.xlu0 %657
        %659 = vrot.lane.b32.xlu0 %v638, 112
        %v660 = vpop.permute.xlu0 %659
        %661 = vrot.lane.b32.xlu0 %v639, 112
        %v662 = vpop.permute.xlu0 %661
        %663 = vrot.lane.b32.xlu0 %v640, 112
        %v664 = vpop.permute.xlu0 %663
        %v673 = vsel %vm323, %v650, 0.0
        %v674 = vsel %vm323, %v652, 0.0
        %v675 = vadd.f32 %v673, %v674
        %v676 = vsel %vm323, %v654, 0.0
        %v677 = vadd.f32 %v675, %v676
        %v678 = vsel %vm323, %v656, 0.0
        %v679 = vadd.f32 %v677, %v678
        %v680 = vsel %vm323, %v658, 0.0
        %v681 = vadd.f32 %v679, %v680
        %v682 = vsel %vm323, %v660, 0.0
        %v683 = vadd.f32 %v681, %v682
        %v684 = vsel %vm323, %v662, 0.0
        %v685 = vadd.f32 %v683, %v684
        %v686 = vsel %vm323, %v664, 0.0
        %v687 = vadd.f32 %v685, %v686
        %688 = vadd.xlane.f32.xlu0 %v687
        %v689 = vpop.xlane.xlu0 %688
        %v690 = vrot.slane %v689, 4
        %v691 = vadd.f32 %v689, %v690
        %v692 = vrot.slane %v691, 2
        %v693 = vadd.f32 %v691, %v692
        %v694 = vrot.slane %v693, 1
        %v695 = vadd.f32 %v693, %v694
        %s696 = vtos %v695
        %v697 = vstv %s696
        %698 = vst [vmem:[%s288] sm:$0xff] %v697
        %s699 = sand.u32 %s186, 1
        %s700 = scalar_lea.sflag [#allocation3], %s699
        %s701 = sand.u32 %s186, 1
        %s702 = smul.addr %s701, 8
        %s703 = scalar_lea.vmem [#allocation2], %s702
        // Predicated region
        $region49: #{tpu_custom_call.1} parent=47 // pred_check
          %p704 = pneg %p196
        $region50: #{tpu_custom_call.1} parent=47 // pred_check_branch
          %706 = sbr.rel (%p704) target = $region52
        $region51: #{tpu_custom_call.1} parent=47 // pred_region
          %708 = vsyncadd %s700, 0
          %s709 = smul.addr %s21, 8
          %s710 = scalar_lea.hbm %s7, %s709
          %s712 = sshll.u32 %s703, 4
          %s713 = int_to_ptr.vmem [resolvable:$true] %s712
          %s714 = sshll.u32 %s710, 4
          %s715 = int_to_ptr.hbm [resolvable:$true] %s714
          %717 = dma.vmem_to_hbm [thread:$0]  %s713, 128, %s715, %s700
        $region52: #{tpu_custom_call.1} parent=47 // pred_fallthru
          _
      $region48: #{tpu_custom_call.1} parent=5 // pred_fallthru
        _
      %p718 = scmp.le.s32.totalorder 2, %s16
      // Predicated region
      $region53: #{tpu_custom_call.1} parent=5 // pred_check
        %p719 = pneg %p718
      $region54: #{tpu_custom_call.1} parent=5 // pred_check_branch
        %721 = sbr.rel (%p719) target = $region56
      $region55: #{tpu_custom_call.1} parent=5 // pred_region
        %s722 = ssub.s32 %s16, 2
        // Predicated region
        $region57: #{tpu_custom_call.1} parent=55 // pred_check
          %p723 = pneg %p202
        $region58: #{tpu_custom_call.1} parent=55 // pred_check_branch
          %725 = sbr.rel (%p723) target = $region60
        $region59: #{tpu_custom_call.1} parent=55 // pred_region
          %s726 = sand.u32 %s187, 1
          %s727 = scalar_lea.sflag [#allocation3], %s726
          %s728 = sand.u32 %s187, 1
          %s729 = smul.addr %s728, 8
          %s730 = scalar_lea.vmem [#allocation2], %s729
          %732 = dma.done %s727, 128
        $region60: #{tpu_custom_call.1} parent=55 // pred_fallthru
          _
      $region56: #{tpu_custom_call.1} parent=5 // pred_fallthru
        _
    $region6: #{tpu_custom_call.1} parent=1 // loop_footer
      %s20 = sadd.s32 1, %s16
    $region7: #{tpu_custom_call.1} parent=1 // loop_footer_branch
      %15 = sbr.rel target = $region3
    $region8: #{tpu_custom_call.1} parent=1 // loop_exit
      _
    %733 = vsyncpa [#allocation3], 1
    %s734 = scalar_lea.sflag [#allocation3], 1
    %735 = vsyncpa %s734, 1

</llo_original>
